<compile_context>
chip_gen: v7x
topology: tpu7x:2x2x1
jax: 0.10.0
libtpu: 0.0.40
codegen_flags: <defaults>
</compile_context>

<pallas_src>
import math
from functools import partial

import jax
import jax.numpy as jnp
from jax.experimental import pallas as pl
from jax.experimental.pallas import tpu as pltpu


def _uw_kernel(scal_ref, li_ref, lsp_ref, out_ref, *, compute_dtype):
    # scal_ref is SMEM f32[4] = [w1, w2, bias, pad], precomputed in the wrapper.
    w1 = scal_ref[0].astype(compute_dtype)
    w2 = scal_ref[1].astype(compute_dtype)
    bias = scal_ref[2].astype(compute_dtype)
    # Cast after load (bf16 I/O halves HBM bytes; compute dtype chosen per-chip).
    li = li_ref[...].astype(compute_dtype)
    lsp = lsp_ref[...].astype(compute_dtype)
    out_ref[...] = (w1 * li + w2 * lsp + bias).astype(out_ref.dtype)


def _scalar_prologue(ls1, ls2):
    """w1 = 1/sigma1^2, w2 = 1/sigma2^2, bias = log(sigma1 + sigma2).

    Uses exp(-2*log_sigma) and a max-shifted logsumexp so both dispatch paths
    share an overflow-robust formulation.
    """
    w1 = jnp.exp(-2.0 * ls1)
    w2 = jnp.exp(-2.0 * ls2)
    m = jnp.maximum(ls1, ls2)
    bias = m + jnp.log(jnp.exp(ls1 - m) + jnp.exp(ls2 - m))
    return w1, w2, bias


def _fallback(li, lsp, w1, w2, bias, out_dtype):
    out = w1 * li.astype(jnp.float32) + w2 * lsp.astype(jnp.float32) + bias
    return out.astype(out_dtype)


def _bf16_vpu_ok():
    # bf16 VALU exists on v6e / v7x; v5e (and older) should keep f32 math.
    try:
        kind = jax.devices()[0].device_kind.lower()
    except Exception:
        return False
    return ("v6" in kind) or ("v7" in kind)


def uncertainty_weighting(loss_invariant, loss_specific, log_sigma1, log_sigma2,
                          *,
                          min_pallas_elems=2 * 1024 * 1024,   # ~8 MiB f32
                          force_pallas=False,
                          target_block_bytes=4 * 1024 * 1024,  # per-array block
                          vmem_limit_bytes=48 * 1024 * 1024):
    """Pallas equivalent of UncertaintyWeighting.forward with size dispatch."""
    li = jnp.asarray(loss_invariant)
    lsp = jnp.asarray(loss_specific)
    ls1 = jnp.asarray(log_sigma1, jnp.float32)
    ls2 = jnp.asarray(log_sigma2, jnp.float32)

    out_shape = jnp.broadcast_shapes(li.shape, lsp.shape)
    n = math.prod(out_shape) if out_shape else 1

    # Output dtype: floating losses keep their promoted float dtype (bf16 stays
    # bf16, matching PyTorch's 0-dim-parameter promotion); int losses -> f32.
    out_dtype = jnp.result_type(li.dtype, lsp.dtype)
    if not jnp.issubdtype(out_dtype, jnp.floating):
        out_dtype = jnp.float32

    # Hoisted scalar prologue (shared by both paths).
    w1, w2, bias = _scalar_prologue(ls1, ls2)

    same_shape = (li.shape == out_shape) and (lsp.shape == out_shape)
    lane_ok = (n % 128 == 0)
    want_pallas = force_pallas or (n >= min_pallas_elems)

    if not (want_pallas and same_shape and lane_ok):
        # Pure elementwise op: when the losses come straight out of producer
        # ops, XLA fuses this for free, whereas a pallas_call always pays a
        # 2-read + 1-write HBM round trip.  Same robust math as the kernel.
        # TODO(synk): in-kernel broadcast (block-0 index_map) for mismatched
        # loss shapes instead of the pure-JAX fallback.
        return _fallback(li, lsp, w1, w2, bias, out_dtype)

    # bf16 multiply-add only when every operand is bf16 and the chip has a
    # bf16 VPU; otherwise f32 math (correct everywhere, HBM-bound anyway).
    if (li.dtype == jnp.bfloat16 and lsp.dtype == jnp.bfloat16
            and out_dtype == jnp.bfloat16 and _bf16_vpu_ok()):
        compute_dtype = jnp.bfloat16
    else:
        compute_dtype = jnp.float32

    # Lane-dense 2-D slab: widest lane count in {1024,512,256,128} dividing n.
    cols = next(c for c in (1024, 512, 256, 128) if n % c == 0)
    rows = n // cols
    li2d = li.reshape(rows, cols)      # contiguous reshape: no copy, no cast
    lsp2d = lsp.reshape(rows, cols)

    itemsize = max(jnp.dtype(li.dtype).itemsize,
                   jnp.dtype(lsp.dtype).itemsize,
                   jnp.dtype(out_dtype).itemsize)
    min_itemsize = min(jnp.dtype(li.dtype).itemsize,
                       jnp.dtype(lsp.dtype).itemsize,
                       jnp.dtype(out_dtype).itemsize)
    # Sublane alignment: 8 rows for 32-bit, 16 for 16-bit, 32 for 8-bit packing.
    align = {4: 8, 2: 16, 1: 32}.get(int(min_itemsize), 8)

    # ~target_block_bytes per array block; 2 inputs + 1 output, double-buffered
    # -> ~6x block bytes live, under the 48 MiB scoped-VMEM limit we request.
    target_rows = max(align, target_block_bytes // (cols * itemsize))
    total_bytes = rows * cols * itemsize

    if rows <= target_rows:
        if total_bytes >= 2 * 1024 * 1024 and rows >= 2 * align:
            # Mid-size slab: guarantee >= 2 grid steps so both v7x TensorCores
            # (dimension_semantics="parallel") get work.
            bm = (((rows + 1) // 2 + align - 1) // align) * align
        else:
            bm = rows                  # block == full array along rows
    else:
        bm = max(align, (target_rows // align) * align)
        steps = -(-rows // bm)
        if steps > 1 and steps % 2 == 1:
            # Prefer an even step count so the 2-TensorCore split is balanced.
            bm_even = ((-(-rows // (steps + 1)) + align - 1) // align) * align
            if bm_even >= align:
                bm = bm_even

    grid = (pl.cdiv(rows, bm),)

    # Pack the hoisted scalars into one SMEM vector: [w1, w2, bias, pad].
    scal = jnp.stack([w1, w2, bias, jnp.zeros_like(w1)]).astype(jnp.float32)

    out2d = pl.pallas_call(
        partial(_uw_kernel, compute_dtype=compute_dtype),
        out_shape=jax.ShapeDtypeStruct((rows, cols), out_dtype),
        grid=grid,
        in_specs=[
            pl.BlockSpec(memory_space=pltpu.MemorySpace.SMEM),   # [w1,w2,bias]
            pl.BlockSpec((bm, cols), lambda i: (i, 0)),          # loss_invariant
            pl.BlockSpec((bm, cols), lambda i: (i, 0)),          # loss_specific
        ],
        out_specs=pl.BlockSpec((bm, cols), lambda i: (i, 0)),
        compiler_params=pltpu.CompilerParams(
            dimension_semantics=("parallel",),                   # megacore / 2-TC
            vmem_limit_bytes=vmem_limit_bytes),
    )(scal, li2d, lsp2d)

    return out2d.reshape(out_shape)


def reference(loss_invariant, loss_specific, log_sigma1, log_sigma2):
    # Literal transcription of the PyTorch forward (naive formulation).
    sigma1 = jnp.exp(log_sigma1)
    sigma2 = jnp.exp(log_sigma2)
    return (1.0 / sigma1 ** 2 * loss_invariant
            + 1.0 / sigma2 ** 2 * loss_specific
            + jnp.log(sigma1 + sigma2))


if __name__ == "__main__":
    key = jax.random.PRNGKey(0)
    k1, k2, k3, k4 = jax.random.split(key, 4)

    # Parameters, matching nn.Parameter(torch.tensor(0.0)).
    log_sigma1 = jnp.float32(0.0)
    log_sigma2 = jnp.float32(0.0)

    # --- Pallas path: small per-element f32 losses (forced through kernel) ---
    loss_invariant = jax.random.uniform(k1, (16, 256), jnp.float32)
    loss_specific = jax.random.uniform(k2, (16, 256), jnp.float32)

    out = uncertainty_weighting(loss_invariant, loss_specific,
                                log_sigma1, log_sigma2, force_pallas=True)
    out = jax.block_until_ready(out)
    ref = reference(loss_invariant, loss_specific, log_sigma1, log_sigma2)
    assert out.shape == ref.shape and out.dtype == ref.dtype
    assert jnp.allclose(out, ref, atol=1e-6, rtol=1e-6)

    # --- Pallas path: bf16 I/O (bf16 MAC on v6e/v7x, f32 math elsewhere) ---
    li_bf = loss_invariant.astype(jnp.bfloat16)
    lsp_bf = loss_specific.astype(jnp.bfloat16)
    out_bf = uncertainty_weighting(li_bf, lsp_bf, log_sigma1, log_sigma2,
                                   force_pallas=True)
    out_bf = jax.block_until_ready(out_bf)
    ref_bf = reference(li_bf.astype(jnp.float32), lsp_bf.astype(jnp.float32),
                       log_sigma1, log_sigma2)
    assert out_bf.dtype == jnp.bfloat16
    assert jnp.allclose(out_bf.astype(jnp.float32), ref_bf, atol=2e-2, rtol=2e-2)

    # --- Pallas path: mid-size f32 slab exercising the >=2-step grid split ---
    li_big = jax.random.uniform(k3, (512, 1024), jnp.float32)
    lsp_big = jax.random.uniform(k4, (512, 1024), jnp.float32)
    ls1_nz = jnp.float32(0.3)
    ls2_nz = jnp.float32(-0.2)
    out_big = uncertainty_weighting(li_big, lsp_big, ls1_nz, ls2_nz,
                                    force_pallas=True)
    out_big = jax.block_until_ready(out_big)
    ref_big = reference(li_big, lsp_big, ls1_nz, ls2_nz)
    assert jnp.allclose(out_big, ref_big, atol=1e-5, rtol=1e-5)

    # --- Dispatch path: scalar losses stay in fused XLA (no kernel launch) ---
    s_out = uncertainty_weighting(jnp.float32(1.5), jnp.float32(2.5),
                                  jnp.float32(0.3), jnp.float32(-0.2))
    s_out = jax.block_until_ready(s_out)
    s_ref = reference(jnp.float32(1.5), jnp.float32(2.5),
                      jnp.float32(0.3), jnp.float32(-0.2))
    assert s_out.dtype == s_ref.dtype
    assert jnp.allclose(s_out, s_ref, atol=1e-5, rtol=1e-5)

    print("KERNEL_OK")
</pallas_src>

<mosaic_0001>
module attributes {stable_mosaic.version = 11 : i64} {
  func.func @_uw_kernel(%arg0: i32, %arg1: memref<4xf32, #tpu.memory_space<smem>>, %arg2: memref<4x1024xf32, #tpu.memory_space<vmem>>, %arg3: memref<4x1024xf32, #tpu.memory_space<vmem>>, %arg4: memref<4x1024xf32, #tpu.memory_space<vmem>>) attributes {dimension_semantics = [#tpu.dimension_semantics<parallel>], iteration_bounds = array<i64: 1>, scalar_prefetch = 0 : i64, scratch_operands = 0 : i64, tpu.core_type = #tpu.core_type<tc>, window_params = [{transform_indices = @transform_0, window_bounds = array<i64: 4>}, {transform_indices = @transform_1, window_bounds = array<i64: 4, 1024>}, {transform_indices = @transform_2, window_bounds = array<i64: 4, 1024>}, {transform_indices = @transform_3, window_bounds = array<i64: 4, 1024>}]} {
    %c0 = arith.constant 0 : index
    %0 = memref.load %arg1[%c0] : memref<4xf32, #tpu.memory_space<smem>>
    %c1 = arith.constant 1 : index
    %1 = memref.load %arg1[%c1] : memref<4xf32, #tpu.memory_space<smem>>
    %c2 = arith.constant 2 : index
    %2 = memref.load %arg1[%c2] : memref<4xf32, #tpu.memory_space<smem>>
    %c0_0 = arith.constant 0 : index
    %c0_1 = arith.constant 0 : index
    %3 = vector.load %arg2[%c0_0, %c0_1] : memref<4x1024xf32, #tpu.memory_space<vmem>>, vector<4x1024xf32>
    %c0_2 = arith.constant 0 : index
    %c0_3 = arith.constant 0 : index
    %4 = vector.load %arg3[%c0_2, %c0_3] : memref<4x1024xf32, #tpu.memory_space<vmem>>, vector<4x1024xf32>
    %5 = vector.broadcast %0 : f32 to vector<4x1024xf32>
    %6 = arith.mulf %5, %3 : vector<4x1024xf32>
    %7 = vector.broadcast %1 : f32 to vector<4x1024xf32>
    %8 = arith.mulf %7, %4 : vector<4x1024xf32>
    %9 = arith.addf %6, %8 : vector<4x1024xf32>
    %10 = vector.broadcast %2 : f32 to vector<4x1024xf32>
    %11 = arith.addf %9, %10 : vector<4x1024xf32>
    %c0_4 = arith.constant 0 : index
    %c0_5 = arith.constant 0 : index
    %12 = vector.load %arg4[%c0_4, %c0_5] : memref<4x1024xf32, #tpu.memory_space<vmem>>, vector<4x1024xf32>
    tpu.vector_store %arg4[%c0_4, %c0_5], %11 {strides = array<i32>} : memref<4x1024xf32, #tpu.memory_space<vmem>>, vector<4x1024xf32>,
    return
  }
  func.func @transform_0(%arg0: i32) -> i32 {
    %c0_i32 = arith.constant 0 : i32
    %c0_i32_0 = arith.constant 0 : i32
    return %c0_i32 : i32
  }
  func.func @transform_1(%arg0: i32) -> (i32, i32) {
    %c0_i32 = arith.constant 0 : i32
    %c0_i32_0 = arith.constant 0 : i32
    return %arg0, %c0_i32 : i32, i32
  }
  func.func @transform_2(%arg0: i32) -> (i32, i32) {
    %c0_i32 = arith.constant 0 : i32
    %c0_i32_0 = arith.constant 0 : i32
    return %arg0, %c0_i32 : i32, i32
  }
  func.func @transform_3(%arg0: i32) -> (i32, i32) {
    %c0_i32 = arith.constant 0 : i32
    %c0_i32_0 = arith.constant 0 : i32
    return %arg0, %c0_i32 : i32, i32
  }
}

</mosaic_0001>

<llo_original>
// kernel: tpu_custom_call.1
$region0: #{tpu_custom_call.1}
  #allocation0 [shape = 'u32[]', space=smem, size = 0x4, offset = 0x4, fixed_abs, tag = 'smem constant byte address 0x4 - core index']
  #allocation1 [shape = 'u32[144,128]{1,0:T(1,128)}', space=vmem, size = 0x12000, scoped, tag = 'internal scratch']
  %s0 = inlined_call_operand.hbm [shape: f32[4], index: 0, kind: input, shape index: {}]
  %s1 = inlined_call_operand.hbm [shape: f32[4,1024], index: 1, kind: input, shape index: {}]
  %s2 = inlined_call_operand.hbm [shape: f32[4,1024], index: 2, kind: input, shape index: {}]
  %s3 = inlined_call_operand.hbm [shape: f32[4,1024], index: 3, kind: output, shape index: {}]
  %s4 = sld [smem:[#allocation0]]
  $region34: #{tpu_custom_call.1} parent=0
    _
  %s6 = ssub.s32 1, %s4
  %s7 = scalar_select 0, %s6, %s4
  $region1: #{tpu_custom_call.1} parent=0
    #allocation2 [shape = 'u8[512]{0}', space=smem, size = 0x200, scoped, tag = 'input window, operand 0, single buffered']
    #allocation3 [shape = 's32[1]{0}', space=sflag, size = 0x4, scoped, tag = 'scoped memory for tpu_custom_call.1']
    #allocation4 [shape = 's32[1]{0}', space=sflag, size = 0x4, scoped, tag = 'scoped memory for tpu_custom_call.1']
    #allocation5 [shape = 's32[1]{0}', space=sflag, size = 0x4, scoped, tag = 'scoped memory for tpu_custom_call.1']
    #allocation6 [shape = 'u8[16384]{0}', space=vmem, size = 0x4000, scoped, tag = 'input window, operand 1, single buffered']
    #allocation7 [shape = 'u8[16384]{0}', space=vmem, size = 0x4000, scoped, tag = 'input window, operand 2, single buffered']
    #allocation8 [shape = 's32[1]{0}', space=sflag, size = 0x4, scoped, tag = 'scoped memory for tpu_custom_call.1']
    #allocation9 [shape = 'u8[16384]{0}', space=vmem, size = 0x4000, scoped, tag = 'output window, operand 0, single buffered']
    %8 = vsyncpa [#allocation5], 0
    %9 = vsyncpa [#allocation3], 0
    %10 = vsyncpa [#allocation8], 0
    %11 = vsyncpa [#allocation4], 0
    // Predicated region
    $region2: #{tpu_custom_call.1} parent=1 // pred_check
      _
    $region3: #{tpu_custom_call.1} parent=1 // pred_check_branch
      %13 = sbr.rel (0) target = $region5
    $region4: #{tpu_custom_call.1} parent=1 // pred_region
      %s15 = ssub.s32 16, 16
      %16 = vsyncadd [#allocation5], %s15
      %19 = dma.hbm_to_smem %s0, 16, [#allocation2], [#allocation5]
    $region5: #{tpu_custom_call.1} parent=1 // pred_fallthru
      _
    // Predicated region
    $region6: #{tpu_custom_call.1} parent=1 // pred_check
      _
    $region7: #{tpu_custom_call.1} parent=1 // pred_check_branch
      %21 = sbr.rel (0) target = $region9
    $region8: #{tpu_custom_call.1} parent=1 // pred_region
      %s23 = ssub.s32 512, 512
      %24 = vsyncadd [#allocation3], %s23
      %s26 = sshll.u32 [#allocation6], 4
      %s27 = int_to_ptr.vmem [resolvable:$true] %s26
      %29 = dma.hbm_to_vmem [thread:$0]  %s1, 512, %s27, [#allocation3]
    $region9: #{tpu_custom_call.1} parent=1 // pred_fallthru
      _
    // Predicated region
    $region10: #{tpu_custom_call.1} parent=1 // pred_check
      _
    $region11: #{tpu_custom_call.1} parent=1 // pred_check_branch
      %31 = sbr.rel (0) target = $region13
    $region12: #{tpu_custom_call.1} parent=1 // pred_region
      %s33 = ssub.s32 512, 512
      %34 = vsyncadd [#allocation8], %s33
      %s36 = sshll.u32 [#allocation7], 4
      %s37 = int_to_ptr.vmem [resolvable:$true] %s36
      %39 = dma.hbm_to_vmem [thread:$0]  %s2, 512, %s37, [#allocation8]
    $region13: #{tpu_custom_call.1} parent=1 // pred_fallthru
      _
    // Predicated region
    $region14: #{tpu_custom_call.1} parent=1 // pred_check
      _
    $region15: #{tpu_custom_call.1} parent=1 // pred_check_branch
      %41 = sbr.rel (0) target = $region17
    $region16: #{tpu_custom_call.1} parent=1 // pred_region
      %42 = dma.done [#allocation5], 16
    $region17: #{tpu_custom_call.1} parent=1 // pred_fallthru
      _
    // Predicated region
    $region18: #{tpu_custom_call.1} parent=1 // pred_check
      _
    $region19: #{tpu_custom_call.1} parent=1 // pred_check_branch
      %44 = sbr.rel (0) target = $region21
    $region20: #{tpu_custom_call.1} parent=1 // pred_region
      %45 = dma.done [#allocation3], 512
    $region21: #{tpu_custom_call.1} parent=1 // pred_fallthru
      _
    // Predicated region
    $region22: #{tpu_custom_call.1} parent=1 // pred_check
      _
    $region23: #{tpu_custom_call.1} parent=1 // pred_check_branch
      %47 = sbr.rel (0) target = $region25
    $region24: #{tpu_custom_call.1} parent=1 // pred_region
      %48 = dma.done [#allocation8], 512
    $region25: #{tpu_custom_call.1} parent=1 // pred_fallthru
      _
    %49 = sfence
    %s50 = sld [smem:[#allocation2]]
    %s51 = sld [smem:[#allocation2 + $0x1]]
    %s52 = sld [smem:[#allocation2 + $0x2]]
    %v53 = vld [vmem:[#allocation6] sm:$0xff]
    %v54 = vld [vmem:[#allocation6 + $0x8] sm:$0xff]
    %v55 = vld [vmem:[#allocation6 + $0x10] sm:$0xff]
    %v56 = vld [vmem:[#allocation6 + $0x18] sm:$0xff]
    %v57 = vld [vmem:[#allocation7] sm:$0xff]
    %v58 = vld [vmem:[#allocation7 + $0x8] sm:$0xff]
    %v59 = vld [vmem:[#allocation7 + $0x10] sm:$0xff]
    %v60 = vld [vmem:[#allocation7 + $0x18] sm:$0xff]
    %v61 = vstv %s50
    %v62 = vmul.f32 %v61, %v53
    %v63 = vmul.f32 %v61, %v54
    %v64 = vmul.f32 %v61, %v55
    %v65 = vmul.f32 %v61, %v56
    %v66 = vstv %s51
    %v67 = vmul.f32 %v66, %v57
    %v68 = vmul.f32 %v66, %v58
    %v69 = vmul.f32 %v66, %v59
    %v70 = vmul.f32 %v66, %v60
    %v71 = vadd.f32 %v62, %v67
    %v72 = vadd.f32 %v63, %v68
    %v73 = vadd.f32 %v64, %v69
    %v74 = vadd.f32 %v65, %v70
    %v75 = vstv %s52
    %v76 = vadd.f32 %v71, %v75
    %v77 = vadd.f32 %v72, %v75
    %v78 = vadd.f32 %v73, %v75
    %v79 = vadd.f32 %v74, %v75
    %80 = vst [vmem:[#allocation9] sm:$0xff] %v76
    %81 = vst [vmem:[#allocation9 + $0x8] sm:$0xff] %v77
    %82 = vst [vmem:[#allocation9 + $0x10] sm:$0xff] %v78
    %83 = vst [vmem:[#allocation9 + $0x18] sm:$0xff] %v79
    // Predicated region
    $region26: #{tpu_custom_call.1} parent=1 // pred_check
      _
    $region27: #{tpu_custom_call.1} parent=1 // pred_check_branch
      %85 = sbr.rel (0) target = $region29
    $region28: #{tpu_custom_call.1} parent=1 // pred_region
      %s87 = ssub.s32 512, 512
      %88 = vsyncadd [#allocation4], %s87
      %s90 = sshll.u32 [#allocation9], 4
      %s91 = int_to_ptr.vmem [resolvable:$true] %s90
      %93 = dma.vmem_to_hbm [thread:$0]  %s91, 512, %s3, [#allocation4]
    $region29: #{tpu_custom_call.1} parent=1 // pred_fallthru
      _
    // Predicated region
    $region30: #{tpu_custom_call.1} parent=1 // pred_check
      _
    $region31: #{tpu_custom_call.1} parent=1 // pred_check_branch
      %95 = sbr.rel (0) target = $region33
    $region32: #{tpu_custom_call.1} parent=1 // pred_region
      %96 = dma.done [#allocation4], 512
    $region33: #{tpu_custom_call.1} parent=1 // pred_fallthru
      _
    %97 = vsyncpa [#allocation3], 1
    %98 = vsyncpa [#allocation8], 1
    %99 = vsyncpa [#allocation4], 1
    %100 = vsyncpa [#allocation5], 1

</llo_original>
